<compile_context>
chip_gen: v5e
topology: v5e:2x2
jax: 0.10.0
libtpu: 0.0.40
codegen_flags: <defaults>
</compile_context>

<pallas_src>
import functools

import jax
import jax.numpy as jnp
from jax.experimental import pallas as pl
from jax.experimental.pallas import tpu as pltpu


def _round_up(x, mult):
    return ((x + mult - 1) // mult) * mult


def _sublane_multiple(dtype):
    # Sublane packing quantum: 8 for 4-byte, 16 for 2-byte, 32 for 1-byte dtypes.
    return {4: 8, 2: 16, 1: 32}.get(jnp.dtype(dtype).itemsize, 8)


# ---------------------------------------------------------------------------
# Main path: lane-dense input blocks (TO, N, 128), lane-dense output (TO, 128).
# ---------------------------------------------------------------------------
def _mean_lane_dense_kernel(a_ref, o_ref, *, inv_n):
    a = a_ref[...]                          # (TO, N, 128)
    if a.dtype != jnp.float32:              # f32 accumulation for bf16 inputs
        a = a.astype(jnp.float32)
    # Sublane-axis reduction: N rows per 128-lane output row.  VPU/XLU only;
    # comfortably hidden under the input DMA even on v7x's 3.2 TB/s HBM.
    o_ref[...] = (jnp.sum(a, axis=1) * inv_n).astype(o_ref.dtype)


def _mean_lane_dense(a2d, m, n, to_tile):
    dtype = a2d.dtype
    itemsize = jnp.dtype(dtype).itemsize

    groups = pl.cdiv(m, 128)                # 128 original rows per output row
    to_tile = min(to_tile, groups)          # full-dim block for tiny inputs
    groups_pad = _round_up(groups, to_tile)
    m_pad = groups_pad * 128
    if m_pad != m:
        a2d = jnp.pad(a2d, ((0, m_pad - m), (0, 0)))

    # Layout plumbing (single XLA relayout pass): (M, N) -> (G, N, 128) so the
    # kernel reads dense 128-lane rows and writes a dense 128-lane output.
    a3 = jnp.transpose(a2d.reshape(groups_pad, 128, n), (0, 2, 1))

    out = pl.pallas_call(
        functools.partial(_mean_lane_dense_kernel, inv_n=1.0 / n),
        out_shape=jax.ShapeDtypeStruct((groups_pad, 128), dtype),
        grid_spec=pltpu.PrefetchScalarGridSpec(
            num_scalar_prefetch=0,
            grid=(groups_pad // to_tile,),
            in_specs=[pl.BlockSpec((to_tile, n, 128), lambda i: (i, 0, 0))],
            out_specs=pl.BlockSpec((to_tile, 128), lambda i: (i, 0)),
        ),
        compiler_params=pltpu.CompilerParams(
            dimension_semantics=("parallel",)),
        cost_estimate=pl.CostEstimate(
            flops=m * n,
            transcendentals=0,
            bytes_accessed=m * n * itemsize + m * itemsize),
    )(a3)

    return out.reshape(m_pad)[:m]


# ---------------------------------------------------------------------------
# Fallback path: very wide rows. Row-tiled lane reduce, output (TM, 1) block.
# ---------------------------------------------------------------------------
def _mean_rowwise_kernel(a_ref, o_ref, *, inv_n):
    a = a_ref[...]
    if a.dtype != jnp.float32:
        a = a.astype(jnp.float32)
    o_ref[...] = (jnp.sum(a, axis=-1, keepdims=True) * inv_n).astype(o_ref.dtype)


def _mean_rowwise(a2d, m, n):
    sub = _sublane_multiple(a2d.dtype)
    itemsize = jnp.dtype(a2d.dtype).itemsize
    bytes_per_row = max(n * itemsize, 1)
    tm = max(sub, min(4096, (2 * 1024 * 1024) // bytes_per_row))
    tm = (tm // sub) * sub
    tm = min(tm, _round_up(m, sub))
    m_pad = _round_up(m, tm)
    if m_pad != m:
        a2d = jnp.pad(a2d, ((0, m_pad - m), (0, 0)))

    out2d = pl.pallas_call(
        functools.partial(_mean_rowwise_kernel, inv_n=1.0 / n),
        out_shape=jax.ShapeDtypeStruct((m_pad, 1), a2d.dtype),
        grid_spec=pltpu.PrefetchScalarGridSpec(
            num_scalar_prefetch=0,
            grid=(m_pad // tm,),
            in_specs=[pl.BlockSpec((tm, n), lambda i: (i, 0))],
            out_specs=pl.BlockSpec((tm, 1), lambda i: (i, 0)),
        ),
        compiler_params=pltpu.CompilerParams(
            dimension_semantics=("parallel",)),
        cost_estimate=pl.CostEstimate(
            flops=m * n,
            transcendentals=0,
            bytes_accessed=m * n * itemsize + m * itemsize),
    )(a2d)

    return out2d[:m, 0]


def sgn_forward(a, s=None):
    """Pallas implementation of SGN.forward(a, s, mode='forward'): a.mean(-1).

    `s` is only stashed by the torch module (no compute), so it is accepted
    and ignored here.
    """
    del s
    orig_shape = a.shape
    n = int(orig_shape[-1])
    m = 1
    for d in orig_shape[:-1]:
        m *= int(d)

    if m == 0 or n == 0:
        # Degenerate shapes: empty output (m == 0) or NaNs (mean over 0 elems).
        fill = jnp.nan if n == 0 else 0
        return jnp.full(orig_shape[:-1], fill, dtype=a.dtype)

    a2d = a.reshape(m, n)
    itemsize = jnp.dtype(a.dtype).itemsize
    sub = _sublane_multiple(a.dtype)

    # Output rows (128 original rows each) per tile: ~2 MiB input per buffer.
    to_budget = (2 * 1024 * 1024) // (n * 128 * itemsize)
    to_target = (to_budget // sub) * sub

    if to_target >= sub:
        flat = _mean_lane_dense(a2d, m, n, to_target)
    else:
        flat = _mean_rowwise(a2d, m, n)
    return flat.reshape(orig_shape[:-1])


if __name__ == "__main__":
    key = jax.random.PRNGKey(0)
    ka, ks = jax.random.split(key)

    # Shapes consistent with the module's forward: a is reduced over its last
    # axis; s is auxiliary state (same leading dims), saved but never used.
    a = jax.random.normal(ka, (2, 4, 16, 16), dtype=jnp.float32)
    s = jax.random.normal(ks, (2, 4, 16, 16), dtype=jnp.float32)

    y = sgn_forward(a, s)
    jax.block_until_ready(y)
    assert y.shape == (2, 4, 16), y.shape
    assert jnp.allclose(y, a.mean(axis=-1), atol=1e-5, rtol=1e-5), \
        "lane-dense path mismatch vs reference"

    # Exercise the multi-tile lane-dense path (grid > 1).
    a_big = jax.random.normal(ka, (16, 16, 256, 16), dtype=jnp.float32)
    y_big = sgn_forward(a_big)
    jax.block_until_ready(y_big)
    assert jnp.allclose(y_big, a_big.mean(axis=-1), atol=1e-5, rtol=1e-5), \
        "multi-tile lane-dense path mismatch vs reference"

    # Last dim that does not divide 128 now also takes the lane-dense path.
    a_odd = jax.random.normal(ks, (2, 4, 16, 48), dtype=jnp.float32)
    y_odd = sgn_forward(a_odd)
    jax.block_until_ready(y_odd)
    assert jnp.allclose(y_odd, a_odd.mean(axis=-1), atol=1e-5, rtol=1e-5), \
        "odd-N lane-dense path mismatch vs reference"

    # Exercise the wide-row fallback path.
    a_wide = jax.random.normal(ka, (16, 4096), dtype=jnp.float32)
    y_wide = sgn_forward(a_wide)
    jax.block_until_ready(y_wide)
    assert jnp.allclose(y_wide, a_wide.mean(axis=-1), atol=1e-5, rtol=1e-4), \
        "wide-row fallback path mismatch vs reference"

    print("KERNEL_OK")
</pallas_src>

<mosaic_0001>
module attributes {stable_mosaic.version = 11 : i64} {
  func.func @_mean_lane_dense_kernel(%arg0: i32, %arg1: memref<1x16x128xf32, #tpu.memory_space<vmem>>, %arg2: memref<1x128xf32, #tpu.memory_space<vmem>>) attributes {dimension_semantics = [#tpu.dimension_semantics<parallel>], iteration_bounds = array<i64: 1>, scalar_prefetch = 0 : i64, scratch_operands = 0 : i64, tpu.core_type = #tpu.core_type<tc>, window_params = [{transform_indices = @transform_0, window_bounds = array<i64: 1, 16, 128>}, {transform_indices = @transform_1, window_bounds = array<i64: 1, 128>}]} {
    %c0 = arith.constant 0 : index
    %c0_0 = arith.constant 0 : index
    %c0_1 = arith.constant 0 : index
    %0 = vector.load %arg1[%c0, %c0_0, %c0_1] : memref<1x16x128xf32, #tpu.memory_space<vmem>>, vector<1x16x128xf32>
    %cst = arith.constant dense<0.000000e+00> : vector<1x128xf32>
    %1 = vector.multi_reduction <add>, %0, %cst [1] : vector<1x16x128xf32> to vector<1x128xf32>
    %cst_2 = arith.constant 6.250000e-02 : f32
    %2 = vector.broadcast %cst_2 : f32 to vector<1x128xf32>
    %3 = arith.mulf %1, %2 : vector<1x128xf32>
    %c0_3 = arith.constant 0 : index
    %c0_4 = arith.constant 0 : index
    %4 = vector.load %arg2[%c0_3, %c0_4] : memref<1x128xf32, #tpu.memory_space<vmem>>, vector<1x128xf32>
    tpu.vector_store %arg2[%c0_3, %c0_4], %3 {strides = array<i32>} : memref<1x128xf32, #tpu.memory_space<vmem>>, vector<1x128xf32>,
    return
  }
  func.func @transform_0(%arg0: i32) -> (i32, i32, i32) {
    %c0_i32 = arith.constant 0 : i32
    %c0_i32_0 = arith.constant 0 : i32
    %c0_i32_1 = arith.constant 0 : i32
    return %arg0, %c0_i32, %c0_i32_0 : i32, i32, i32
  }
  func.func @transform_1(%arg0: i32) -> (i32, i32) {
    %c0_i32 = arith.constant 0 : i32
    %c0_i32_0 = arith.constant 0 : i32
    return %arg0, %c0_i32 : i32, i32
  }
}

</mosaic_0001>

<llo_original>
// kernel: tpu_custom_call.1
$region0: #{tpu_custom_call.1}
  #allocation0 [shape = 'u32[]', space=smem, size = 0x4, offset = 0x4, fixed_abs, tag = 'smem constant byte address 0x4 - core index']
  #allocation1 [shape = 'u32[72,128]{1,0:T(1,128)}', space=vmem, size = 0x9000, scoped, tag = 'internal scratch']
  %s0 = inlined_call_operand.hbm [shape: f32[1,16,128], index: 0, kind: input, shape index: {}]
  %s1 = inlined_call_operand.hbm [shape: f32[1,128], index: 1, kind: output, shape index: {}]
  %s2 = sld [smem:[#allocation0]]
  $region18: #{tpu_custom_call.1} parent=0
    _
  %s4 = ssub.s32 1, %s2
  %s5 = scalar_select 0, %s4, %s2
  $region1: #{tpu_custom_call.1} parent=0
    #allocation2 [shape = 'u8[8192]{0}', space=vmem, size = 0x2000, scoped, tag = 'input window, operand 0, single buffered']
    #allocation3 [shape = 's32[1]{0}', space=sflag, size = 0x4, scoped, tag = 'scoped memory for tpu_custom_call.1']
    #allocation4 [shape = 's32[1]{0}', space=sflag, size = 0x4, scoped, tag = 'scoped memory for tpu_custom_call.1']
    #allocation5 [shape = 'u8[512]{0}', space=vmem, size = 0x400, scoped, tag = 'output window, operand 0, single buffered']
    %6 = vsyncpa [#allocation3], 0
    %7 = vsyncpa [#allocation4], 0
    // Predicated region
    $region2: #{tpu_custom_call.1} parent=1 // pred_check
      _
    $region3: #{tpu_custom_call.1} parent=1 // pred_check_branch
      %9 = sbr.rel (0) target = $region5
    $region4: #{tpu_custom_call.1} parent=1 // pred_region
      %11 = vsyncadd [#allocation3], 0
      %s12 = sshll.u32 %s0, 4
      %s13 = int_to_ptr.hbm [resolvable:$true] %s12
      %s14 = sshll.u32 [#allocation2], 4
      %s15 = int_to_ptr.vmem [resolvable:$true] %s14
      %20 = dma.hbm_to_vmem [thread:$0]  %s13, 256, %s15, [#allocation3], 128, 128, 8
    $region5: #{tpu_custom_call.1} parent=1 // pred_fallthru
      _
    // Predicated region
    $region6: #{tpu_custom_call.1} parent=1 // pred_check
      _
    $region7: #{tpu_custom_call.1} parent=1 // pred_check_branch
      %22 = sbr.rel (0) target = $region9
    $region8: #{tpu_custom_call.1} parent=1 // pred_region
      %24 = dma.done [#allocation3], 256
    $region9: #{tpu_custom_call.1} parent=1 // pred_fallthru
      _
    %v25 = vld [vmem:[#allocation2] sm:$0xff]
    %v26 = vld [vmem:[#allocation2 + $0x8] sm:$0xff]
    %v27 = vadd.f32 %v25, %v26
    %v28 = vrot.slane %v27, 4
    %v29 = vadd.f32 %v27, %v28
    %v30 = vrot.slane %v29, 2
    %v31 = vadd.f32 %v29, %v30
    %v32 = vrot.slane %v31, 1
    %v33 = vadd.f32 %v31, %v32
    %v34 = vmul.f32 %v33, 0.0625
    %35 = vst [vmem:[#allocation5] sm:$0x1] %v34
    // Predicated region
    $region10: #{tpu_custom_call.1} parent=1 // pred_check
      _
    $region11: #{tpu_custom_call.1} parent=1 // pred_check_branch
      %37 = sbr.rel (0) target = $region13
    $region12: #{tpu_custom_call.1} parent=1 // pred_region
      %39 = vsyncadd [#allocation4], 0
      %s41 = sshll.u32 [#allocation5], 4
      %s42 = int_to_ptr.vmem [resolvable:$true] %s41
      %s43 = sshll.u32 %s1, 4
      %s44 = int_to_ptr.hbm [resolvable:$true] %s43
      %46 = dma.vmem_to_hbm [thread:$0]  %s42, 16, %s44, [#allocation4]
    $region13: #{tpu_custom_call.1} parent=1 // pred_fallthru
      _
    // Predicated region
    $region14: #{tpu_custom_call.1} parent=1 // pred_check
      _
    $region15: #{tpu_custom_call.1} parent=1 // pred_check_branch
      %48 = sbr.rel (0) target = $region17
    $region16: #{tpu_custom_call.1} parent=1 // pred_region
      %50 = dma.done [#allocation4], 16
    $region17: #{tpu_custom_call.1} parent=1 // pred_fallthru
      _
    %51 = vsyncpa [#allocation3], 1
    %52 = vsyncpa [#allocation4], 1

</llo_original>
